<compile_context>
chip_gen: v7x
topology: tpu7x:2x2x1
jax: 0.10.0
libtpu: 0.0.40
codegen_flags: <defaults>
</compile_context>

<pallas_src>
import functools

import jax
import jax.numpy as jnp
from jax.experimental import pallas as pl
from jax.experimental.pallas import tpu as pltpu


def _rel_pos_bias_kernel(idx_ref, table_ref, out_ref):
    idx = idx_ref[...]            # (1, tile_n) int32  (lane-dense flat indices)
    tbl = table_ref[...]          # (V, Hp)  compute dtype (bf16 or f32)
    V = tbl.shape[0]
    tile_n = idx.shape[1]

    # one-hot(indices) laid out as (V, tile_n): onehot[v, n] = (v == idx[n]),
    # emitted directly in the matmul dtype (no separate f32 cast pass).
    iota_v = jax.lax.broadcasted_iota(jnp.int32, (V, tile_n), 0)
    onehot = (iota_v == idx).astype(tbl.dtype)                 # (V, tile_n)

    # gather-as-matmul on the MXU, contracting over V (dim 0 of both):
    #   (V, Hp)^T . (V, tile_n) -> (Hp, tile_n), f32 accumulation.
    acc = jax.lax.dot_general(
        tbl, onehot,
        dimension_numbers=(((0,), (0,)), ((), ())),
        preferred_element_type=jnp.float32,
    )
    out_ref[...] = acc.astype(out_ref.dtype)


@functools.partial(jax.jit, static_argnames=("out_dtype",))
def relative_positional_bias(table: jax.Array, indices: jax.Array,
                             *, out_dtype=jnp.float32) -> jax.Array:
    """table: (V, H) embedding table; indices: (N, N) int32, values in [0, V).
    Returns (H, N, N) bias in `out_dtype`, matching the PyTorch forward()."""
    V, H = table.shape
    N, N_ = indices.shape
    assert N == N_
    N2 = N * N

    # Sublane-dense output rows: pad heads up to a multiple of 8.
    Hp = ((H + 7) // 8) * 8
    # Lane-dense output: pad N2 up to 128, then tile the lane dim when large
    # (bounds the (V, tile) one-hot in VMEM; parallel grid -> 2 TCs on v7x).
    N2p128 = ((N2 + 127) // 128) * 128
    tile_n = N2p128 if N2p128 <= 2048 else 1024
    grid_n = (N2p128 + tile_n - 1) // tile_n
    N2p = grid_n * tile_n

    # One-time parameter prep (in a model: do this once per step, not per
    # forward).  bf16 compute path when the consumer is bf16 -> single-pass
    # MXU matmul; exact for a one-hot gather.
    compute_dtype = jnp.bfloat16 if out_dtype == jnp.bfloat16 else jnp.float32
    tbl = table.astype(compute_dtype)
    if Hp != H:
        tbl = jnp.pad(tbl, ((0, 0), (0, Hp - H)))              # zero head rows

    idx_flat = indices.reshape(1, N2).astype(jnp.int32)
    if N2p != N2:
        # Padding indices are 0 (a valid row); padded columns are sliced off.
        idx_flat = jnp.pad(idx_flat, ((0, 0), (0, N2p - N2)))

    cost = pl.CostEstimate(
        flops=2 * Hp * N2p * V,
        transcendentals=0,
        bytes_accessed=(idx_flat.size * 4
                        + tbl.size * jnp.dtype(compute_dtype).itemsize
                        + Hp * N2p * jnp.dtype(out_dtype).itemsize),
    )

    out = pl.pallas_call(
        _rel_pos_bias_kernel,
        out_shape=jax.ShapeDtypeStruct((Hp, N2p), out_dtype),
        grid=(grid_n,),
        in_specs=[
            pl.BlockSpec((1, tile_n), lambda i: (0, i)),       # lane-tiled idx
            pl.BlockSpec((V, Hp), lambda i: (0, 0)),           # table resident
        ],
        out_specs=pl.BlockSpec((Hp, tile_n), lambda i: (0, i)),
        compiler_params=pltpu.CompilerParams(
            dimension_semantics=("parallel",)),
        cost_estimate=cost,
    )(idx_flat, tbl)

    return out[:H, :N2].reshape(H, N, N)


def build_indices(window_size: int) -> jax.Array:
    """Reproduces the PyTorch __init__ buffer computation (plain JAX glue)."""
    wdiff = 2 * window_size - 1
    axis = jnp.arange(window_size)
    gi, gj = jnp.meshgrid(axis, axis, indexing="ij")
    grid = jnp.stack([gi, gj], axis=-1)                       # (ws, ws, 2)
    flat = grid.reshape(-1, 1, 2) - grid.reshape(1, -1, 2)    # (N, N, 2)
    flat = flat - flat.min()
    indices = flat @ jnp.array([wdiff, 1])                    # (N, N)
    return indices.astype(jnp.int32)


def _check(heads: int, window_size: int, key, out_dtype=jnp.float32) -> None:
    wdiff = 2 * window_size - 1
    V = wdiff * wdiff
    N = window_size * window_size

    table = jax.random.normal(key, (V, heads), dtype=jnp.float32)
    indices = build_indices(window_size)                      # (N, N) int32

    out = relative_positional_bias(table, indices, out_dtype=out_dtype)
    out = jax.block_until_ready(out)

    # Reference in plain JAX: table[indices] -> (N, N, H) -> (H, N, N).
    ref_tbl = table.astype(jnp.bfloat16) if out_dtype == jnp.bfloat16 else table
    ref = jnp.transpose(ref_tbl[indices], (2, 0, 1)).astype(out_dtype)

    assert out.shape == (heads, N, N), out.shape
    assert out.dtype == out_dtype, out.dtype
    assert jnp.allclose(out.astype(jnp.float32), ref.astype(jnp.float32),
                        atol=1e-6), "mismatch vs reference"


if __name__ == "__main__":
    key = jax.random.PRNGKey(0)
    k1, k2, k3 = jax.random.split(key, 3)

    # Small config (N2 = 256, lane-aligned, single tile).
    _check(heads=4, window_size=4, key=k1)
    # Realistic Swin config (heads=6 -> padded to 8; N2 = 2401 -> 2432),
    # exercising the bf16 single-pass MXU path.
    _check(heads=6, window_size=7, key=k2, out_dtype=jnp.bfloat16)
    # Larger window (N2 = 6561 -> 7 lane tiles) exercising the parallel grid.
    _check(heads=3, window_size=9, key=k3)

    print("KERNEL_OK")
</pallas_src>

<mosaic_0001>
module attributes {stable_mosaic.version = 11 : i64} {
  func.func @_rel_pos_bias_kernel(%arg0: i32, %arg1: memref<1x256xi32, #tpu.memory_space<vmem>>, %arg2: memref<49x8xf32, #tpu.memory_space<vmem>>, %arg3: memref<8x256xf32, #tpu.memory_space<vmem>>) attributes {dimension_semantics = [#tpu.dimension_semantics<parallel>], iteration_bounds = array<i64: 1>, scalar_prefetch = 0 : i64, scratch_operands = 0 : i64, tpu.core_type = #tpu.core_type<tc>, window_params = [{transform_indices = @transform_0, window_bounds = array<i64: 1, 256>}, {pipeline_mode = #tpu.pipeline_mode<synchronous>, transform_indices = @transform_1, window_bounds = array<i64: 49, 8>}, {transform_indices = @transform_2, window_bounds = array<i64: 8, 256>}]} {
    %c0 = arith.constant 0 : index
    %c0_0 = arith.constant 0 : index
    %0 = vector.load %arg1[%c0, %c0_0] : memref<1x256xi32, #tpu.memory_space<vmem>>, vector<1x256xi32>
    %c0_1 = arith.constant 0 : index
    %c0_2 = arith.constant 0 : index
    %1 = vector.load %arg2[%c0_1, %c0_2] : memref<49x8xf32, #tpu.memory_space<vmem>>, vector<49x8xf32>
    %2 = tpu.iota {dimensions = array<i32: 0>} : vector<49x256xi32>
    %3 = vector.broadcast %0 : vector<1x256xi32> to vector<49x256xi32>
    %4 = arith.cmpi eq, %2, %3 : vector<49x256xi32>
    %5 = arith.extui %4 : vector<49x256xi1> to vector<49x256xi32>
    %6 = arith.sitofp %5 : vector<49x256xi32> to vector<49x256xf32>
    %cst = arith.constant dense<0.000000e+00> : vector<8x256xf32>
    %7 = tpu.matmul %1, %6, %cst {dimension_numbers = #tpu.dot_dimension_numbers<[0], [0], [1], [1], [0, 1, 1, 1], [], []>} : vector<49x8xf32>, vector<49x256xf32>, vector<8x256xf32> -> vector<8x256xf32>
    %c0_3 = arith.constant 0 : index
    %c0_4 = arith.constant 0 : index
    %8 = vector.load %arg3[%c0_3, %c0_4] : memref<8x256xf32, #tpu.memory_space<vmem>>, vector<8x256xf32>
    tpu.vector_store %arg3[%c0_3, %c0_4], %7 {strides = array<i32>} : memref<8x256xf32, #tpu.memory_space<vmem>>, vector<8x256xf32>,
    return
  }
  func.func @transform_0(%arg0: i32) -> (i32, i32) {
    %c0_i32 = arith.constant 0 : i32
    %c0_i32_0 = arith.constant 0 : i32
    return %c0_i32, %arg0 : i32, i32
  }
  func.func @transform_1(%arg0: i32) -> (i32, i32) {
    %c0_i32 = arith.constant 0 : i32
    %c0_i32_0 = arith.constant 0 : i32
    %c0_i32_1 = arith.constant 0 : i32
    return %c0_i32, %c0_i32_0 : i32, i32
  }
  func.func @transform_2(%arg0: i32) -> (i32, i32) {
    %c0_i32 = arith.constant 0 : i32
    %c0_i32_0 = arith.constant 0 : i32
    return %c0_i32, %arg0 : i32, i32
  }
}

</mosaic_0001>

<llo_original>
// kernel: relative_positional_bias.1
$region0: #{relative_positional_bias.1}
  #allocation0 [shape = 'u32[]', space=smem, size = 0x4, offset = 0x4, fixed_abs, tag = 'smem constant byte address 0x4 - core index']
  #allocation1 [shape = 'u32[144,128]{1,0:T(1,128)}', space=vmem, size = 0x12000, scoped, tag = 'internal scratch']
  %s0 = inlined_call_operand.vmem [shape: s32[1,256], index: 0, kind: input, shape index: {}]
  %s1 = inlined_call_operand.vmem [shape: f32[49,8], index: 1, kind: input, shape index: {}]
  %s2 = inlined_call_operand.vmem [shape: f32[8,256], index: 2, kind: output, shape index: {}]
  %s3 = sld [smem:[#allocation0]]
  $region18: #{relative_positional_bias.1} parent=0
    _
  %s5 = ssub.s32 1, %s3
  %s6 = scalar_select 0, %s5, %s3
  // Predicated region
  $region2: #{relative_positional_bias.1} parent=0 // pred_check
    _
  $region3: #{relative_positional_bias.1} parent=0 // pred_check_branch
    %8 = sbr.rel (0) target = $region5
  $region4: #{relative_positional_bias.1} parent=0 // pred_region
    _
  $region5: #{relative_positional_bias.1} parent=0 // pred_fallthru
    _
  // Predicated region
  $region6: #{relative_positional_bias.1} parent=0 // pred_check
    _
  $region7: #{relative_positional_bias.1} parent=0 // pred_check_branch
    %10 = sbr.rel (0) target = $region9
  $region8: #{relative_positional_bias.1} parent=0 // pred_region
    _
  $region9: #{relative_positional_bias.1} parent=0 // pred_fallthru
    _
  %v11 = vld [vmem:[%s0] sm:$0x3]
  %v12 = vld [vmem:[%s1] sm:$0xff]
  %v13 = vld [vmem:[%s1 + $0x8] sm:$0xff]
  %v14 = vld [vmem:[%s1 + $0x10] sm:$0xff]
  %v15 = vld [vmem:[%s1 + $0x18] sm:$0xff]
  %v16 = vld [vmem:[%s1 + $0x20] sm:$0xff]
  %v17 = vld [vmem:[%s1 + $0x28] sm:$0xff]
  %v18 = vld [vmem:[%s1 + $0x30] sm:$0x1]
  %v19 = vlaneseq
  %v20 = vshrl.u32 %v19, 7
  %v21 = vadd.s32 %v20, 8
  %v22 = vadd.s32 %v20, 16
  %v23 = vadd.s32 %v20, 24
  %v24 = vadd.s32 %v20, 32
  %v25 = vadd.s32 %v20, 40
  %v26 = vadd.s32 %v20, 48
  %v27 = vlaneseq
  %v28 = vshrl.u32 %v27, 7
  %v29 = vsub.s32 0, %v28
  %v30 = vrot.slane %v11, %v29
  %v31 = vlaneseq
  %v32 = vshrl.u32 %v31, 7
  %v33 = vsub.s32 1, %v32
  %v34 = vrot.slane %v11, %v33
  %vm35 = vcmp.eq.s32.totalorder %v20, %v30
  %vm36 = vcmp.eq.s32.totalorder %v20, %v34
  %vm37 = vcmp.eq.s32.totalorder %v21, %v30
  %vm38 = vcmp.eq.s32.totalorder %v21, %v34
  %vm39 = vcmp.eq.s32.totalorder %v22, %v30
  %vm40 = vcmp.eq.s32.totalorder %v22, %v34
  %vm41 = vcmp.eq.s32.totalorder %v23, %v30
  %vm42 = vcmp.eq.s32.totalorder %v23, %v34
  %vm43 = vcmp.eq.s32.totalorder %v24, %v30
  %vm44 = vcmp.eq.s32.totalorder %v24, %v34
  %vm45 = vcmp.eq.s32.totalorder %v25, %v30
  %vm46 = vcmp.eq.s32.totalorder %v25, %v34
  %vm47 = vcmp.eq.s32.totalorder %v26, %v30
  %vm48 = vcmp.eq.s32.totalorder %v26, %v34
  %v49 = vsel %vm35, 1, 0
  %v50 = vsel %vm36, 1, 0
  %v51 = vsel %vm37, 1, 0
  %v52 = vsel %vm38, 1, 0
  %v53 = vsel %vm39, 1, 0
  %v54 = vsel %vm40, 1, 0
  %v55 = vsel %vm41, 1, 0
  %v56 = vsel %vm42, 1, 0
  %v57 = vsel %vm43, 1, 0
  %v58 = vsel %vm44, 1, 0
  %v59 = vsel %vm45, 1, 0
  %v60 = vsel %vm46, 1, 0
  %v61 = vsel %vm47, 1, 0
  %v62 = vsel %vm48, 1, 0
  %v63 = vcvt.s32.f32 %v49
  %v64 = vcvt.s32.f32 %v50
  %v65 = vcvt.s32.f32 %v51
  %v66 = vcvt.s32.f32 %v52
  %v67 = vcvt.s32.f32 %v53
  %v68 = vcvt.s32.f32 %v54
  %v69 = vcvt.s32.f32 %v55
  %v70 = vcvt.s32.f32 %v56
  %v71 = vcvt.s32.f32 %v57
  %v72 = vcvt.s32.f32 %v58
  %v73 = vcvt.s32.f32 %v59
  %v74 = vcvt.s32.f32 %v60
  %v75 = vcvt.s32.f32 %v61
  %v76 = vcvt.s32.f32 %v62
  %77 = vxpose.xlu0.b32.start [1/16] %v12, 128
  %78 = vxpose.xlu0.b32.cont [2/16] %v13, 128
  %79 = vxpose.xlu0.b32.cont [3/16] %v14, 128
  %80 = vxpose.xlu0.b32.cont [4/16] %v15, 128
  %81 = vxpose.xlu0.b32.cont [5/16] %v16, 128
  %82 = vxpose.xlu0.b32.cont [6/16] %v17, 128
  %83 = vxpose.xlu0.b32.cont [7/16] %v18, 128
  %84 = vxpose.xlu0.b32.cont [8/16] 0.0, 128
  %85 = vxpose.xlu0.b32.cont [9/16] 0.0, 128
  %86 = vxpose.xlu0.b32.cont [10/16] 0.0, 128
  %87 = vxpose.xlu0.b32.cont [11/16] 0.0, 128
  %88 = vxpose.xlu0.b32.cont [12/16] 0.0, 128
  %89 = vxpose.xlu0.b32.cont [13/16] 0.0, 128
  %90 = vxpose.xlu0.b32.cont [14/16] 0.0, 128
  %91 = vxpose.xlu0.b32.cont [15/16] 0.0, 128
  %92 = vxpose.xlu0.b32.end [16/16] 0.0, 128
  %v93 = vpop.trf.xlu0
  %v94 = vpop.trf.xlu0
  %v95 = vpop.trf.xlu0
  %v96 = vpop.trf.xlu0
  %v97 = vpop.trf.xlu0
  %v98 = vpop.trf.xlu0
  %v99 = vpop.trf.xlu0
  %v100 = vpop.trf.xlu0
  %v101 = vpop.trf.xlu0
  %v102 = vpop.trf.xlu0
  %v103 = vpop.trf.xlu0
  %v104 = vpop.trf.xlu0
  %v105 = vpop.trf.xlu0
  %v106 = vpop.trf.xlu0
  %v107 = vpop.trf.xlu0
  %v108 = vpop.trf.xlu0
  %vm109 = vcmask 400384
  %v111 = vsel %vm109, %v93, 0
  %vm113 = vcmask 1040384
  %v115 = vsel %vm113, %v75, 0
  %v118 = vsel %vm113, %v76, 0
  %120 = vmatprep.subr.mxu0 %v64
  %121 = vmatpush1.msra.mxu0 %v63
  %122 = vmatprep.subr.mxu0 %v66
  %123 = vmatpush1.msra.mxu0 %v65
  %124 = vmatprep.subr.mxu0 %v68
  %125 = vmatpush1.msra.mxu0 %v67
  %126 = vmatprep.subr.mxu0 %v70
  %127 = vmatpush1.msra.mxu0 %v69
  %128 = vmatprep.subr.mxu0 %v72
  %129 = vmatpush1.msra.mxu0 %v71
  %130 = vmatprep.subr.mxu0 %v74
  %131 = vmatpush1.msra.mxu0 %v73
  %132 = vmatprep.subr.mxu0 %v118
  %133 = vmatpush1.msra.mxu0 %v115
  %134 = vmatprep.subr.mxu0 0.0
  %135 = vmatpush1.msra.mxu0 0.0
  %136 = vmatprep.subr.mxu0 0.0
  %137 = vmatpush1.msra.mxu0 0.0
  %138 = vmatprep.subr.mxu0 0.0
  %139 = vmatpush1.msra.mxu0 0.0
  %140 = vmatprep.subr.mxu0 0.0
  %141 = vmatpush1.msra.mxu0 0.0
  %142 = vmatprep.subr.mxu0 0.0
  %143 = vmatpush1.msra.mxu0 0.0
  %144 = vmatprep.subr.mxu0 0.0
  %145 = vmatpush1.msra.mxu0 0.0
  %146 = vmatprep.subr.mxu0 0.0
  %147 = vmatpush1.msra.mxu0 0.0
  %148 = vmatprep.subr.mxu0 0.0
  %149 = vmatpush1.msra.mxu0 0.0
  %150 = vmatprep.subr.mxu0 0.0
  %151 = vmatpush1.msra.mxu0 0.0
  %152 = vmatprep.subr.mxu0 0.0
  %153 = vmatpush1.msra.mxu0 0.0
  %154 = vmatprep.subr.mxu0 0.0
  %155 = vmatpush1.msra.mxu0 0.0
  %156 = vmatprep.subr.mxu0 0.0
  %157 = vmatpush1.msra.mxu0 0.0
  %158 = vmatprep.subr.mxu0 0.0
  %159 = vmatpush1.msra.mxu0 0.0
  %160 = vmatprep.subr.mxu0 0.0
  %161 = vmatpush1.msra.mxu0 0.0
  %162 = vmatprep.subr.mxu0 0.0
  %163 = vmatpush1.msra.mxu0 0.0
  %164 = vmatprep.subr.mxu0 0.0
  %165 = vmatpush1.msra.mxu0 0.0
  %166 = vmatprep.subr.mxu0 0.0
  %167 = vmatpush1.msra.mxu0 0.0
  %168 = vmatprep.subr.mxu0 0.0
  %169 = vmatpush1.msra.mxu0 0.0
  %170 = vmatprep.subr.mxu0 0.0
  %171 = vmatpush1.msra.mxu0 0.0
  %172 = vmatprep.subr.mxu0 0.0
  %173 = vmatpush1.msra.mxu0 0.0
  %174 = vmatprep.subr.mxu0 0.0
  %175 = vmatpush1.msra.mxu0 0.0
  %176 = vmatprep.subr.mxu0 0.0
  %177 = vmatpush1.msra.mxu0 0.0
  %178 = vmatprep.subr.mxu0 0.0
  %179 = vmatpush1.msra.mxu0 0.0
  %180 = vmatprep.subr.mxu0 0.0
  %181 = vmatpush1.msra.mxu0 0.0
  %182 = vmatprep.subr.mxu0 0.0
  %183 = vmatpush1.msra.mxu0 0.0
  %184 = vmatprep.mubr.f32.mxu0 0.0
  %185 = vmatmul.mubr.f32.gmra.mrb[0].mxu0 %v111
  %v186 = vpop.f32.mrb[0].mxu0
  %v187 = vadd.f32 0.0, %v186
  %v188 = vpop.f32.mrb[0].mxu0
  %v189 = vadd.f32 0.0, %v188
  %190 = vdwg.mxu0
  %191 = vst [vmem:[%s2] sm:$0xff] %v187
  %192 = vst [vmem:[%s2 + $0x8] sm:$0xff] %v189
  // Predicated region
  $region10: #{relative_positional_bias.1} parent=0 // pred_check
    _
  $region11: #{relative_positional_bias.1} parent=0 // pred_check_branch
    %194 = sbr.rel (0) target = $region13
  $region12: #{relative_positional_bias.1} parent=0 // pred_region
    _
  $region13: #{relative_positional_bias.1} parent=0 // pred_fallthru
    _
  // Predicated region
  $region14: #{relative_positional_bias.1} parent=0 // pred_check
    _
  $region15: #{relative_positional_bias.1} parent=0 // pred_check_branch
    %196 = sbr.rel (0) target = $region17
  $region16: #{relative_positional_bias.1} parent=0 // pred_region
    _
  $region17: #{relative_positional_bias.1} parent=0 // pred_fallthru
    _

</llo_original>
